<compile_context>
chip_gen: v7x
topology: tpu7x:2x2x1
jax: 0.10.0
libtpu: 0.0.40
codegen_flags: <defaults>
</compile_context>

<pallas_src>
import functools
import math

import jax
import jax.numpy as jnp
from jax.experimental import pallas as pl
from jax.experimental.pallas import tpu as pltpu


def _gather_columns(gt, idx, *, use_vpu_select):
    """gathered[c, j] = gt[c, idx[0, j]] for gt (4, B*N) f32, idx (1, B*P) int32."""
    n_rows, bn = gt.shape
    _, bp = idx.shape
    if use_vpu_select:
        # Tiny gather table: unrolled compare+select on the VPU.  B*N iterations,
        # each one lane-broadcast (XLU slot) + one compare + one select (VALU).
        acc = jnp.zeros((n_rows, bp), jnp.float32)
        for m in range(bn):
            col = jnp.broadcast_to(gt[:, m:m + 1], (n_rows, bp))
            acc = jnp.where(idx == m, col, acc)
        return acc
    # Larger table: one-hot matmul, transposed so the MXU result's lane
    # dimension is B*P (lane dense), not 4.
    iota = jax.lax.broadcasted_iota(jnp.int32, (bn, bp), 0)
    onehot = (iota == idx).astype(jnp.float32)                      # (B*N, B*P)
    return jnp.dot(gt, onehot, preferred_element_type=jnp.float32)  # (4, B*P)


def _perturb_kernel_t(gt_ref, scale_ref, idx_ref, t_ref, noise_ref, out_ref,
                      *, gaussian_error: float, use_vpu_select: bool):
    gt = gt_ref[...].astype(jnp.float32)        # (4, B*N)  gt boxes, coord-major
    scale = scale_ref[...].astype(jnp.float32)  # (4, B*P)  [w,h,w,h] per proposal
    idx = idx_ref[...]                          # (1, B*P)  int32 flat gather index
    t = t_ref[...].astype(jnp.float32)          # (1, B*P)  diffusion timestep
    noise = noise_ref[...].astype(jnp.float32)  # (4, B*P)  standard normal

    gathered = _gather_columns(gt, idx, use_vpu_select=use_vpu_select)

    # alpha = (1 - ge)^t ; compute sqrt(alpha) via one EUP exp, square for alpha.
    log_a = jnp.float32(math.log1p(-gaussian_error))
    sqrt_alpha = jnp.exp((0.5 * log_a) * t)          # (1, B*P)
    alpha = sqrt_alpha * sqrt_alpha
    sqrt_1m_alpha = jnp.sqrt(1.0 - alpha)

    # prior = gathered * sqrt(alpha) + scale * noise * sqrt(1 - alpha)
    out_ref[...] = (gathered * sqrt_alpha
                    + scale * noise * sqrt_1m_alpha).astype(out_ref.dtype)


def _perturb_kernel_no_t(gt_ref, scale_ref, idx_ref, noise_ref, out_ref,
                         *, gaussian_error: float, use_vpu_select: bool):
    gt = gt_ref[...].astype(jnp.float32)
    scale = scale_ref[...].astype(jnp.float32)
    idx = idx_ref[...]
    noise = noise_ref[...].astype(jnp.float32)

    gathered = _gather_columns(gt, idx, use_vpu_select=use_vpu_select)

    ca = jnp.float32(math.sqrt(1.0 - gaussian_error))
    cb = jnp.float32(math.sqrt(gaussian_error))
    out_ref[...] = (gathered * ca + scale * noise * cb).astype(out_ref.dtype)


def perturbed_ground_truth(gt_boxes, scale, sampled_indices, t, noise,
                           *, gaussian_error: float, use_t: bool):
    """Pallas implementation of PerturbedGroundTruth.forward (non-empty-gt branch).

    Args:
      gt_boxes:        (B, N, 4) float32  per-image ground-truth boxes (pixel coords).
      scale:           (B, 4)    float32  per-image [w, h, w, h].
      sampled_indices: (B, P)    int32    randint(N) per proposal ("original_gt").
      t:               (B, P)    int32    randint(1000) per proposal (ignored if not use_t).
      noise:           (B, P, 4) float32  standard normal noise.
    Returns dict mirroring the module's per-item outputs.
    """
    B, N, _ = gt_boxes.shape
    _, P = sampled_indices.shape
    BN, BP = B * N, B * P

    # Wrapper-side layout plumbing: coords -> sublanes, batch*proposals -> lanes.
    gt_t = jnp.transpose(gt_boxes.reshape(BN, 4)).astype(jnp.float32)       # (4, BN)
    scale_bp = jnp.broadcast_to(scale.reshape(B, 1, 4), (B, P, 4))
    scale_t = jnp.transpose(scale_bp.reshape(BP, 4)).astype(jnp.float32)    # (4, BP)
    noise_t = jnp.transpose(noise.reshape(BP, 4)).astype(jnp.float32)       # (4, BP)
    flat_idx = (sampled_indices.astype(jnp.int32)
                + jnp.arange(B, dtype=jnp.int32)[:, None] * N).reshape(1, BP)

    use_vpu_select = BN <= 32

    if use_t:
        kernel = functools.partial(_perturb_kernel_t,
                                   gaussian_error=gaussian_error,
                                   use_vpu_select=use_vpu_select)
        inputs = (gt_t, scale_t, flat_idx, t.astype(jnp.int32).reshape(1, BP), noise_t)
    else:
        # Trace-time specialization: no t input, no exp.
        kernel = functools.partial(_perturb_kernel_no_t,
                                   gaussian_error=gaussian_error,
                                   use_vpu_select=use_vpu_select)
        inputs = (gt_t, scale_t, flat_idx, noise_t)

    vmem_spec = pl.BlockSpec(memory_space=pltpu.MemorySpace.VMEM)
    prior_cm = pl.pallas_call(
        kernel,
        out_shape=jax.ShapeDtypeStruct((4, BP), jnp.float32),
        in_specs=[vmem_spec] * len(inputs),
        out_specs=vmem_spec,
    )(*inputs)

    prior = jnp.transpose(prior_cm).reshape(B, P, 4)

    out = {"proposal_boxes": prior, "original_gt": sampled_indices}
    if use_t:
        out["prior_t"] = t
    return out
    # TODO(synk): the len(gt_boxes) == 0 branch (prior = scale * randn, prior_t = 1000)
    # is a data-dependent per-image Python branch over ragged inputs; handled outside
    # the kernel in a real pipeline.


def _reference(gt_boxes, scale, sampled_indices, t, noise, *, gaussian_error, use_t):
    B = gt_boxes.shape[0]
    scale_b = scale.reshape(B, 1, 4)
    idx4 = jnp.broadcast_to(sampled_indices[..., None], sampled_indices.shape + (4,))
    gathered = jnp.take_along_axis(gt_boxes, idx4, axis=1)
    sampled = gathered / scale_b
    if use_t:
        alpha = (1.0 - gaussian_error) ** t.astype(jnp.float32)[..., None]
        corrupted = sampled * jnp.sqrt(alpha) + noise * jnp.sqrt(1.0 - alpha)
    else:
        corrupted = (sampled * math.sqrt(1.0 - gaussian_error)
                     + noise * math.sqrt(gaussian_error))
    return scale_b * corrupted


if __name__ == "__main__":
    key = jax.random.PRNGKey(0)
    k_gt, k_idx, k_t, k_noise, k_gt2, k_idx2 = jax.random.split(key, 6)

    gaussian_error = 0.1
    H = W = 16

    # Config 1: small gt table (VPU select gather path), use_t=True and use_t=False.
    B, N, P = 2, 8, 64
    gt_boxes = jax.random.uniform(k_gt, (B, N, 4), jnp.float32) * W
    scale = jnp.broadcast_to(jnp.array([W, H, W, H], jnp.float32)[None], (B, 4))
    sampled_indices = jax.random.randint(k_idx, (B, P), 0, N, jnp.int32)
    t = jax.random.randint(k_t, (B, P), 0, 1000, jnp.int32)
    noise = jax.random.normal(k_noise, (B, P, 4), jnp.float32)

    out = perturbed_ground_truth(gt_boxes, scale, sampled_indices, t, noise,
                                 gaussian_error=gaussian_error, use_t=True)
    prior = jax.block_until_ready(out["proposal_boxes"])
    ref = _reference(gt_boxes, scale, sampled_indices, t, noise,
                     gaussian_error=gaussian_error, use_t=True)
    assert prior.shape == (B, P, 4)
    assert jnp.allclose(prior, ref, atol=1e-3, rtol=1e-3), "use_t=True mismatch"

    out_nt = perturbed_ground_truth(gt_boxes, scale, sampled_indices, None, noise,
                                    gaussian_error=gaussian_error, use_t=False)
    prior_nt = jax.block_until_ready(out_nt["proposal_boxes"])
    ref_nt = _reference(gt_boxes, scale, sampled_indices, t, noise,
                        gaussian_error=gaussian_error, use_t=False)
    assert jnp.allclose(prior_nt, ref_nt, atol=1e-3, rtol=1e-3), "use_t=False mismatch"

    # Config 2: larger gt table (transposed one-hot MXU gather path).
    N2 = 64
    gt_boxes2 = jax.random.uniform(k_gt2, (B, N2, 4), jnp.float32) * W
    sampled_indices2 = jax.random.randint(k_idx2, (B, P), 0, N2, jnp.int32)
    out2 = perturbed_ground_truth(gt_boxes2, scale, sampled_indices2, t, noise,
                                  gaussian_error=gaussian_error, use_t=True)
    prior2 = jax.block_until_ready(out2["proposal_boxes"])
    ref2 = _reference(gt_boxes2, scale, sampled_indices2, t, noise,
                      gaussian_error=gaussian_error, use_t=True)
    assert jnp.allclose(prior2, ref2, atol=1e-3, rtol=1e-3), "MXU gather mismatch"

    print("KERNEL_OK")
</pallas_src>

<mosaic_0001>
module attributes {stable_mosaic.version = 11 : i64} {
  func.func @_perturb_kernel_t(%arg0: memref<4x16xf32, #tpu.memory_space<vmem>>, %arg1: memref<4x128xf32, #tpu.memory_space<vmem>>, %arg2: memref<1x128xi32, #tpu.memory_space<vmem>>, %arg3: memref<1x128xi32, #tpu.memory_space<vmem>>, %arg4: memref<4x128xf32, #tpu.memory_space<vmem>>, %arg5: memref<4x128xf32, #tpu.memory_space<vmem>>) attributes {dimension_semantics = [], scalar_prefetch = 0 : i64, scratch_operands = 0 : i64, tpu.core_type = #tpu.core_type<tc>} {
    %c0 = arith.constant 0 : index
    %c0_0 = arith.constant 0 : index
    %0 = vector.load %arg0[%c0, %c0_0] : memref<4x16xf32, #tpu.memory_space<vmem>>, vector<4x16xf32>
    %c0_1 = arith.constant 0 : index
    %c0_2 = arith.constant 0 : index
    %1 = vector.load %arg1[%c0_1, %c0_2] : memref<4x128xf32, #tpu.memory_space<vmem>>, vector<4x128xf32>
    %c0_3 = arith.constant 0 : index
    %c0_4 = arith.constant 0 : index
    %2 = vector.load %arg2[%c0_3, %c0_4] : memref<1x128xi32, #tpu.memory_space<vmem>>, vector<1x128xi32>
    %c0_5 = arith.constant 0 : index
    %c0_6 = arith.constant 0 : index
    %3 = vector.load %arg3[%c0_5, %c0_6] : memref<1x128xi32, #tpu.memory_space<vmem>>, vector<1x128xi32>
    %4 = arith.sitofp %3 : vector<1x128xi32> to vector<1x128xf32>
    %c0_7 = arith.constant 0 : index
    %c0_8 = arith.constant 0 : index
    %5 = vector.load %arg4[%c0_7, %c0_8] : memref<4x128xf32, #tpu.memory_space<vmem>>, vector<4x128xf32>
    %cst = arith.constant 0.000000e+00 : f32
    %6 = vector.broadcast %cst : f32 to vector<4x128xf32>
    %7 = vector.extract_strided_slice %0 {offsets = [0, 0], sizes = [4, 1], strides = [1, 1]} : vector<4x16xf32> to vector<4x1xf32>
    %8 = vector.shape_cast %7 : vector<4x1xf32> to vector<4x1xf32>
    %9 = vector.broadcast %8 : vector<4x1xf32> to vector<4x128xf32>
    %c0_i32 = arith.constant 0 : i32
    %10 = vector.broadcast %c0_i32 : i32 to vector<1x128xi32>
    %11 = arith.cmpi eq, %2, %10 : vector<1x128xi32>
    %12 = vector.shape_cast %11 : vector<1x128xi1> to vector<1x128xi1>
    %13 = vector.broadcast %12 : vector<1x128xi1> to vector<4x128xi1>
    %14 = arith.select %13, %9, %6 : vector<4x128xi1>, vector<4x128xf32>
    %15 = vector.extract_strided_slice %0 {offsets = [0, 1], sizes = [4, 1], strides = [1, 1]} : vector<4x16xf32> to vector<4x1xf32>
    %16 = vector.shape_cast %15 : vector<4x1xf32> to vector<4x1xf32>
    %17 = vector.broadcast %16 : vector<4x1xf32> to vector<4x128xf32>
    %c1_i32 = arith.constant 1 : i32
    %18 = vector.broadcast %c1_i32 : i32 to vector<1x128xi32>
    %19 = arith.cmpi eq, %2, %18 : vector<1x128xi32>
    %20 = vector.shape_cast %19 : vector<1x128xi1> to vector<1x128xi1>
    %21 = vector.broadcast %20 : vector<1x128xi1> to vector<4x128xi1>
    %22 = arith.select %21, %17, %14 : vector<4x128xi1>, vector<4x128xf32>
    %23 = vector.extract_strided_slice %0 {offsets = [0, 2], sizes = [4, 1], strides = [1, 1]} : vector<4x16xf32> to vector<4x1xf32>
    %24 = vector.shape_cast %23 : vector<4x1xf32> to vector<4x1xf32>
    %25 = vector.broadcast %24 : vector<4x1xf32> to vector<4x128xf32>
    %c2_i32 = arith.constant 2 : i32
    %26 = vector.broadcast %c2_i32 : i32 to vector<1x128xi32>
    %27 = arith.cmpi eq, %2, %26 : vector<1x128xi32>
    %28 = vector.shape_cast %27 : vector<1x128xi1> to vector<1x128xi1>
    %29 = vector.broadcast %28 : vector<1x128xi1> to vector<4x128xi1>
    %30 = arith.select %29, %25, %22 : vector<4x128xi1>, vector<4x128xf32>
    %31 = vector.extract_strided_slice %0 {offsets = [0, 3], sizes = [4, 1], strides = [1, 1]} : vector<4x16xf32> to vector<4x1xf32>
    %32 = vector.shape_cast %31 : vector<4x1xf32> to vector<4x1xf32>
    %33 = vector.broadcast %32 : vector<4x1xf32> to vector<4x128xf32>
    %c3_i32 = arith.constant 3 : i32
    %34 = vector.broadcast %c3_i32 : i32 to vector<1x128xi32>
    %35 = arith.cmpi eq, %2, %34 : vector<1x128xi32>
    %36 = vector.shape_cast %35 : vector<1x128xi1> to vector<1x128xi1>
    %37 = vector.broadcast %36 : vector<1x128xi1> to vector<4x128xi1>
    %38 = arith.select %37, %33, %30 : vector<4x128xi1>, vector<4x128xf32>
    %39 = vector.extract_strided_slice %0 {offsets = [0, 4], sizes = [4, 1], strides = [1, 1]} : vector<4x16xf32> to vector<4x1xf32>
    %40 = vector.shape_cast %39 : vector<4x1xf32> to vector<4x1xf32>
    %41 = vector.broadcast %40 : vector<4x1xf32> to vector<4x128xf32>
    %c4_i32 = arith.constant 4 : i32
    %42 = vector.broadcast %c4_i32 : i32 to vector<1x128xi32>
    %43 = arith.cmpi eq, %2, %42 : vector<1x128xi32>
    %44 = vector.shape_cast %43 : vector<1x128xi1> to vector<1x128xi1>
    %45 = vector.broadcast %44 : vector<1x128xi1> to vector<4x128xi1>
    %46 = arith.select %45, %41, %38 : vector<4x128xi1>, vector<4x128xf32>
    %47 = vector.extract_strided_slice %0 {offsets = [0, 5], sizes = [4, 1], strides = [1, 1]} : vector<4x16xf32> to vector<4x1xf32>
    %48 = vector.shape_cast %47 : vector<4x1xf32> to vector<4x1xf32>
    %49 = vector.broadcast %48 : vector<4x1xf32> to vector<4x128xf32>
    %c5_i32 = arith.constant 5 : i32
    %50 = vector.broadcast %c5_i32 : i32 to vector<1x128xi32>
    %51 = arith.cmpi eq, %2, %50 : vector<1x128xi32>
    %52 = vector.shape_cast %51 : vector<1x128xi1> to vector<1x128xi1>
    %53 = vector.broadcast %52 : vector<1x128xi1> to vector<4x128xi1>
    %54 = arith.select %53, %49, %46 : vector<4x128xi1>, vector<4x128xf32>
    %55 = vector.extract_strided_slice %0 {offsets = [0, 6], sizes = [4, 1], strides = [1, 1]} : vector<4x16xf32> to vector<4x1xf32>
    %56 = vector.shape_cast %55 : vector<4x1xf32> to vector<4x1xf32>
    %57 = vector.broadcast %56 : vector<4x1xf32> to vector<4x128xf32>
    %c6_i32 = arith.constant 6 : i32
    %58 = vector.broadcast %c6_i32 : i32 to vector<1x128xi32>
    %59 = arith.cmpi eq, %2, %58 : vector<1x128xi32>
    %60 = vector.shape_cast %59 : vector<1x128xi1> to vector<1x128xi1>
    %61 = vector.broadcast %60 : vector<1x128xi1> to vector<4x128xi1>
    %62 = arith.select %61, %57, %54 : vector<4x128xi1>, vector<4x128xf32>
    %63 = vector.extract_strided_slice %0 {offsets = [0, 7], sizes = [4, 1], strides = [1, 1]} : vector<4x16xf32> to vector<4x1xf32>
    %64 = vector.shape_cast %63 : vector<4x1xf32> to vector<4x1xf32>
    %65 = vector.broadcast %64 : vector<4x1xf32> to vector<4x128xf32>
    %c7_i32 = arith.constant 7 : i32
    %66 = vector.broadcast %c7_i32 : i32 to vector<1x128xi32>
    %67 = arith.cmpi eq, %2, %66 : vector<1x128xi32>
    %68 = vector.shape_cast %67 : vector<1x128xi1> to vector<1x128xi1>
    %69 = vector.broadcast %68 : vector<1x128xi1> to vector<4x128xi1>
    %70 = arith.select %69, %65, %62 : vector<4x128xi1>, vector<4x128xf32>
    %71 = vector.extract_strided_slice %0 {offsets = [0, 8], sizes = [4, 1], strides = [1, 1]} : vector<4x16xf32> to vector<4x1xf32>
    %72 = vector.shape_cast %71 : vector<4x1xf32> to vector<4x1xf32>
    %73 = vector.broadcast %72 : vector<4x1xf32> to vector<4x128xf32>
    %c8_i32 = arith.constant 8 : i32
    %74 = vector.broadcast %c8_i32 : i32 to vector<1x128xi32>
    %75 = arith.cmpi eq, %2, %74 : vector<1x128xi32>
    %76 = vector.shape_cast %75 : vector<1x128xi1> to vector<1x128xi1>
    %77 = vector.broadcast %76 : vector<1x128xi1> to vector<4x128xi1>
    %78 = arith.select %77, %73, %70 : vector<4x128xi1>, vector<4x128xf32>
    %79 = vector.extract_strided_slice %0 {offsets = [0, 9], sizes = [4, 1], strides = [1, 1]} : vector<4x16xf32> to vector<4x1xf32>
    %80 = vector.shape_cast %79 : vector<4x1xf32> to vector<4x1xf32>
    %81 = vector.broadcast %80 : vector<4x1xf32> to vector<4x128xf32>
    %c9_i32 = arith.constant 9 : i32
    %82 = vector.broadcast %c9_i32 : i32 to vector<1x128xi32>
    %83 = arith.cmpi eq, %2, %82 : vector<1x128xi32>
    %84 = vector.shape_cast %83 : vector<1x128xi1> to vector<1x128xi1>
    %85 = vector.broadcast %84 : vector<1x128xi1> to vector<4x128xi1>
    %86 = arith.select %85, %81, %78 : vector<4x128xi1>, vector<4x128xf32>
    %87 = vector.extract_strided_slice %0 {offsets = [0, 10], sizes = [4, 1], strides = [1, 1]} : vector<4x16xf32> to vector<4x1xf32>
    %88 = vector.shape_cast %87 : vector<4x1xf32> to vector<4x1xf32>
    %89 = vector.broadcast %88 : vector<4x1xf32> to vector<4x128xf32>
    %c10_i32 = arith.constant 10 : i32
    %90 = vector.broadcast %c10_i32 : i32 to vector<1x128xi32>
    %91 = arith.cmpi eq, %2, %90 : vector<1x128xi32>
    %92 = vector.shape_cast %91 : vector<1x128xi1> to vector<1x128xi1>
    %93 = vector.broadcast %92 : vector<1x128xi1> to vector<4x128xi1>
    %94 = arith.select %93, %89, %86 : vector<4x128xi1>, vector<4x128xf32>
    %95 = vector.extract_strided_slice %0 {offsets = [0, 11], sizes = [4, 1], strides = [1, 1]} : vector<4x16xf32> to vector<4x1xf32>
    %96 = vector.shape_cast %95 : vector<4x1xf32> to vector<4x1xf32>
    %97 = vector.broadcast %96 : vector<4x1xf32> to vector<4x128xf32>
    %c11_i32 = arith.constant 11 : i32
    %98 = vector.broadcast %c11_i32 : i32 to vector<1x128xi32>
    %99 = arith.cmpi eq, %2, %98 : vector<1x128xi32>
    %100 = vector.shape_cast %99 : vector<1x128xi1> to vector<1x128xi1>
    %101 = vector.broadcast %100 : vector<1x128xi1> to vector<4x128xi1>
    %102 = arith.select %101, %97, %94 : vector<4x128xi1>, vector<4x128xf32>
    %103 = vector.extract_strided_slice %0 {offsets = [0, 12], sizes = [4, 1], strides = [1, 1]} : vector<4x16xf32> to vector<4x1xf32>
    %104 = vector.shape_cast %103 : vector<4x1xf32> to vector<4x1xf32>
    %105 = vector.broadcast %104 : vector<4x1xf32> to vector<4x128xf32>
    %c12_i32 = arith.constant 12 : i32
    %106 = vector.broadcast %c12_i32 : i32 to vector<1x128xi32>
    %107 = arith.cmpi eq, %2, %106 : vector<1x128xi32>
    %108 = vector.shape_cast %107 : vector<1x128xi1> to vector<1x128xi1>
    %109 = vector.broadcast %108 : vector<1x128xi1> to vector<4x128xi1>
    %110 = arith.select %109, %105, %102 : vector<4x128xi1>, vector<4x128xf32>
    %111 = vector.extract_strided_slice %0 {offsets = [0, 13], sizes = [4, 1], strides = [1, 1]} : vector<4x16xf32> to vector<4x1xf32>
    %112 = vector.shape_cast %111 : vector<4x1xf32> to vector<4x1xf32>
    %113 = vector.broadcast %112 : vector<4x1xf32> to vector<4x128xf32>
    %c13_i32 = arith.constant 13 : i32
    %114 = vector.broadcast %c13_i32 : i32 to vector<1x128xi32>
    %115 = arith.cmpi eq, %2, %114 : vector<1x128xi32>
    %116 = vector.shape_cast %115 : vector<1x128xi1> to vector<1x128xi1>
    %117 = vector.broadcast %116 : vector<1x128xi1> to vector<4x128xi1>
    %118 = arith.select %117, %113, %110 : vector<4x128xi1>, vector<4x128xf32>
    %119 = vector.extract_strided_slice %0 {offsets = [0, 14], sizes = [4, 1], strides = [1, 1]} : vector<4x16xf32> to vector<4x1xf32>
    %120 = vector.shape_cast %119 : vector<4x1xf32> to vector<4x1xf32>
    %121 = vector.broadcast %120 : vector<4x1xf32> to vector<4x128xf32>
    %c14_i32 = arith.constant 14 : i32
    %122 = vector.broadcast %c14_i32 : i32 to vector<1x128xi32>
    %123 = arith.cmpi eq, %2, %122 : vector<1x128xi32>
    %124 = vector.shape_cast %123 : vector<1x128xi1> to vector<1x128xi1>
    %125 = vector.broadcast %124 : vector<1x128xi1> to vector<4x128xi1>
    %126 = arith.select %125, %121, %118 : vector<4x128xi1>, vector<4x128xf32>
    %127 = vector.extract_strided_slice %0 {offsets = [0, 15], sizes = [4, 1], strides = [1, 1]} : vector<4x16xf32> to vector<4x1xf32>
    %128 = vector.shape_cast %127 : vector<4x1xf32> to vector<4x1xf32>
    %129 = vector.broadcast %128 : vector<4x1xf32> to vector<4x128xf32>
    %c15_i32 = arith.constant 15 : i32
    %130 = vector.broadcast %c15_i32 : i32 to vector<1x128xi32>
    %131 = arith.cmpi eq, %2, %130 : vector<1x128xi32>
    %132 = vector.shape_cast %131 : vector<1x128xi1> to vector<1x128xi1>
    %133 = vector.broadcast %132 : vector<1x128xi1> to vector<4x128xi1>
    %134 = arith.select %133, %129, %126 : vector<4x128xi1>, vector<4x128xf32>
    %cst_9 = arith.constant 5.000000e-01 : f32
    %cst_10 = arith.constant -0.105360515 : f32
    %135 = arith.mulf %cst_9, %cst_10 : f32
    %136 = vector.broadcast %135 : f32 to vector<1x128xf32>
    %137 = arith.mulf %136, %4 : vector<1x128xf32>
    %138 = math.exp %137 : vector<1x128xf32>
    %139 = arith.mulf %138, %138 : vector<1x128xf32>
    %cst_11 = arith.constant 1.000000e+00 : f32
    %140 = vector.broadcast %cst_11 : f32 to vector<1x128xf32>
    %141 = arith.subf %140, %139 : vector<1x128xf32>
    %142 = math.sqrt %141 : vector<1x128xf32>
    %143 = vector.broadcast %138 : vector<1x128xf32> to vector<4x128xf32>
    %144 = arith.mulf %134, %143 : vector<4x128xf32>
    %145 = arith.mulf %1, %5 : vector<4x128xf32>
    %146 = vector.broadcast %142 : vector<1x128xf32> to vector<4x128xf32>
    %147 = arith.mulf %145, %146 : vector<4x128xf32>
    %148 = arith.addf %144, %147 : vector<4x128xf32>
    %c0_12 = arith.constant 0 : index
    %c0_13 = arith.constant 0 : index
    %149 = vector.load %arg5[%c0_12, %c0_13] : memref<4x128xf32, #tpu.memory_space<vmem>>, vector<4x128xf32>
    tpu.vector_store %arg5[%c0_12, %c0_13], %148 {strides = array<i32>} : memref<4x128xf32, #tpu.memory_space<vmem>>, vector<4x128xf32>,
    return
  }
}

</mosaic_0001>

<llo_original>
// kernel: tpu_custom_call.1
$region0: #{tpu_custom_call.1}
  #allocation0 [shape = 'u32[]', space=smem, size = 0x4, offset = 0x4, fixed_abs, tag = 'smem constant byte address 0x4 - core index']
  #allocation1 [shape = 'u32[144,128]{1,0:T(1,128)}', space=vmem, size = 0x12000, scoped, tag = 'internal scratch']
  %s0 = inlined_call_operand.hbm [shape: f32[4,16], index: 0, kind: input, shape index: {}]
  %s1 = inlined_call_operand.hbm [shape: f32[4,128], index: 1, kind: input, shape index: {}]
  %s2 = inlined_call_operand.vmem [shape: s32[1,128], index: 2, kind: input, shape index: {}]
  %s3 = inlined_call_operand.vmem [shape: s32[1,128], index: 3, kind: input, shape index: {}]
  %s4 = inlined_call_operand.vmem [shape: f32[4,128], index: 4, kind: input, shape index: {}]
  %s5 = inlined_call_operand.hbm [shape: f32[4,128], index: 5, kind: output, shape index: {}]
  %s6 = sld [smem:[#allocation0]]
  $region38: #{tpu_custom_call.1} parent=0
    _
  %s8 = ssub.s32 1, %s6
  %s9 = scalar_select 0, %s8, %s6
  $region1: #{tpu_custom_call.1} parent=0
    #allocation2 [shape = 'u8[2048]{0}', space=vmem, size = 0x800, scoped, tag = 'input window, operand 0, single buffered']
    #allocation3 [shape = 's32[1]{0}', space=sflag, size = 0x4, scoped, tag = 'scoped memory for tpu_custom_call.1']
    #allocation4 [shape = 's32[1]{0}', space=sflag, size = 0x4, scoped, tag = 'scoped memory for tpu_custom_call.1']
    #allocation5 [shape = 'u8[2048]{0}', space=vmem, size = 0x800, scoped, tag = 'input window, operand 1, single buffered']
    #allocation6 [shape = 's32[1]{0}', space=sflag, size = 0x4, scoped, tag = 'scoped memory for tpu_custom_call.1']
    #allocation7 [shape = 'u8[2048]{0}', space=vmem, size = 0x800, scoped, tag = 'output window, operand 0, single buffered']
    %10 = vsyncpa [#allocation3], 0
    %11 = vsyncpa [#allocation6], 0
    %12 = vsyncpa [#allocation4], 0
    // Predicated region
    $region2: #{tpu_custom_call.1} parent=1 // pred_check
      _
    $region3: #{tpu_custom_call.1} parent=1 // pred_check_branch
      %14 = sbr.rel (0) target = $region5
    $region4: #{tpu_custom_call.1} parent=1 // pred_region
      %s16 = ssub.s32 64, 64
      %17 = vsyncadd [#allocation3], %s16
      %s19 = sshll.u32 [#allocation2], 4
      %s20 = int_to_ptr.vmem [resolvable:$true] %s19
      %22 = dma.hbm_to_vmem [thread:$0]  %s0, 64, %s20, [#allocation3]
    $region5: #{tpu_custom_call.1} parent=1 // pred_fallthru
      _
    // Predicated region
    $region6: #{tpu_custom_call.1} parent=1 // pred_check
      _
    $region7: #{tpu_custom_call.1} parent=1 // pred_check_branch
      %24 = sbr.rel (0) target = $region9
    $region8: #{tpu_custom_call.1} parent=1 // pred_region
      %s26 = ssub.s32 64, 64
      %27 = vsyncadd [#allocation6], %s26
      %s29 = sshll.u32 [#allocation5], 4
      %s30 = int_to_ptr.vmem [resolvable:$true] %s29
      %32 = dma.hbm_to_vmem [thread:$0]  %s1, 64, %s30, [#allocation6]
    $region9: #{tpu_custom_call.1} parent=1 // pred_fallthru
      _
    // Predicated region
    $region10: #{tpu_custom_call.1} parent=1 // pred_check
      _
    $region11: #{tpu_custom_call.1} parent=1 // pred_check_branch
      %34 = sbr.rel (0) target = $region13
    $region12: #{tpu_custom_call.1} parent=1 // pred_region
      _
    $region13: #{tpu_custom_call.1} parent=1 // pred_fallthru
      _
    // Predicated region
    $region14: #{tpu_custom_call.1} parent=1 // pred_check
      _
    $region15: #{tpu_custom_call.1} parent=1 // pred_check_branch
      %36 = sbr.rel (0) target = $region17
    $region16: #{tpu_custom_call.1} parent=1 // pred_region
      _
    $region17: #{tpu_custom_call.1} parent=1 // pred_fallthru
      _
    // Predicated region
    $region18: #{tpu_custom_call.1} parent=1 // pred_check
      _
    $region19: #{tpu_custom_call.1} parent=1 // pred_check_branch
      %38 = sbr.rel (0) target = $region21
    $region20: #{tpu_custom_call.1} parent=1 // pred_region
      _
    $region21: #{tpu_custom_call.1} parent=1 // pred_fallthru
      _
    // Predicated region
    $region22: #{tpu_custom_call.1} parent=1 // pred_check
      _
    $region23: #{tpu_custom_call.1} parent=1 // pred_check_branch
      %40 = sbr.rel (0) target = $region25
    $region24: #{tpu_custom_call.1} parent=1 // pred_region
      %41 = dma.done [#allocation3], 64
    $region25: #{tpu_custom_call.1} parent=1 // pred_fallthru
      _
    // Predicated region
    $region26: #{tpu_custom_call.1} parent=1 // pred_check
      _
    $region27: #{tpu_custom_call.1} parent=1 // pred_check_branch
      %43 = sbr.rel (0) target = $region29
    $region28: #{tpu_custom_call.1} parent=1 // pred_region
      %44 = dma.done [#allocation6], 64
    $region29: #{tpu_custom_call.1} parent=1 // pred_fallthru
      _
    %v45 = vld [vmem:[#allocation2] sm:$0xf]
    %v46 = vld [vmem:[#allocation5] sm:$0xf]
    %v47 = vld [vmem:[%s2] sm:$0x1]
    %v48 = vld [vmem:[%s3] sm:$0x1]
    %v49 = vcvt.s32.f32 %v48
    %v50 = vld [vmem:[%s4] sm:$0xf]
    %52 = vset.pattern.permute.xlu0 0
    %53 = vperm.xlu0 %52, %v45
    %v54 = vpop.permute.xlu0 %53
    %vm56 = vcmp.eq.s32.totalorder %v47, 0
    %v57 = vsel %vm56, 1, 0
    %v58 = vlaneseq
    %v59 = vshrl.u32 %v58, 7
    %v60 = vsub.s32 0, %v59
    %v61 = vrot.slane %v57, %v60
    %vm62 = vcmp.eq.s32.totalorder %v61, 1
    %v63 = vsel %vm62, %v54, 0.0
    %64 = vset.pattern.permute.xlu0 1
    %65 = vperm.xlu0 %64, %v45
    %v66 = vpop.permute.xlu0 %65
    %vm68 = vcmp.eq.s32.totalorder %v47, 1
    %v69 = vsel %vm68, 1, 0
    %v70 = vlaneseq
    %v71 = vshrl.u32 %v70, 7
    %v72 = vsub.s32 0, %v71
    %v73 = vrot.slane %v69, %v72
    %vm74 = vcmp.eq.s32.totalorder %v73, 1
    %v75 = vsel %vm74, %v66, %v63
    %76 = vset.pattern.permute.xlu0 2
    %77 = vperm.xlu0 %76, %v45
    %v78 = vpop.permute.xlu0 %77
    %vm80 = vcmp.eq.s32.totalorder %v47, 2
    %v81 = vsel %vm80, 1, 0
    %v82 = vlaneseq
    %v83 = vshrl.u32 %v82, 7
    %v84 = vsub.s32 0, %v83
    %v85 = vrot.slane %v81, %v84
    %vm86 = vcmp.eq.s32.totalorder %v85, 1
    %v87 = vsel %vm86, %v78, %v75
    %88 = vset.pattern.permute.xlu0 3
    %89 = vperm.xlu0 %88, %v45
    %v90 = vpop.permute.xlu0 %89
    %vm92 = vcmp.eq.s32.totalorder %v47, 3
    %v93 = vsel %vm92, 1, 0
    %v94 = vlaneseq
    %v95 = vshrl.u32 %v94, 7
    %v96 = vsub.s32 0, %v95
    %v97 = vrot.slane %v93, %v96
    %vm98 = vcmp.eq.s32.totalorder %v97, 1
    %v99 = vsel %vm98, %v90, %v87
    %100 = vset.pattern.permute.xlu0 4
    %101 = vperm.xlu0 %100, %v45
    %v102 = vpop.permute.xlu0 %101
    %vm104 = vcmp.eq.s32.totalorder %v47, 4
    %v105 = vsel %vm104, 1, 0
    %v106 = vlaneseq
    %v107 = vshrl.u32 %v106, 7
    %v108 = vsub.s32 0, %v107
    %v109 = vrot.slane %v105, %v108
    %vm110 = vcmp.eq.s32.totalorder %v109, 1
    %v111 = vsel %vm110, %v102, %v99
    %112 = vset.pattern.permute.xlu0 5
    %113 = vperm.xlu0 %112, %v45
    %v114 = vpop.permute.xlu0 %113
    %vm116 = vcmp.eq.s32.totalorder %v47, 5
    %v117 = vsel %vm116, 1, 0
    %v118 = vlaneseq
    %v119 = vshrl.u32 %v118, 7
    %v120 = vsub.s32 0, %v119
    %v121 = vrot.slane %v117, %v120
    %vm122 = vcmp.eq.s32.totalorder %v121, 1
    %v123 = vsel %vm122, %v114, %v111
    %124 = vset.pattern.permute.xlu0 6
    %125 = vperm.xlu0 %124, %v45
    %v126 = vpop.permute.xlu0 %125
    %vm128 = vcmp.eq.s32.totalorder %v47, 6
    %v129 = vsel %vm128, 1, 0
    %v130 = vlaneseq
    %v131 = vshrl.u32 %v130, 7
    %v132 = vsub.s32 0, %v131
    %v133 = vrot.slane %v129, %v132
    %vm134 = vcmp.eq.s32.totalorder %v133, 1
    %v135 = vsel %vm134, %v126, %v123
    %136 = vset.pattern.permute.xlu0 7
    %137 = vperm.xlu0 %136, %v45
    %v138 = vpop.permute.xlu0 %137
    %vm140 = vcmp.eq.s32.totalorder %v47, 7
    %v141 = vsel %vm140, 1, 0
    %v142 = vlaneseq
    %v143 = vshrl.u32 %v142, 7
    %v144 = vsub.s32 0, %v143
    %v145 = vrot.slane %v141, %v144
    %vm146 = vcmp.eq.s32.totalorder %v145, 1
    %v147 = vsel %vm146, %v138, %v135
    %148 = vset.pattern.permute.xlu0 8
    %149 = vperm.xlu0 %148, %v45
    %v150 = vpop.permute.xlu0 %149
    %vm152 = vcmp.eq.s32.totalorder %v47, 8
    %v153 = vsel %vm152, 1, 0
    %v154 = vlaneseq
    %v155 = vshrl.u32 %v154, 7
    %v156 = vsub.s32 0, %v155
    %v157 = vrot.slane %v153, %v156
    %vm158 = vcmp.eq.s32.totalorder %v157, 1
    %v159 = vsel %vm158, %v150, %v147
    %160 = vset.pattern.permute.xlu0 9
    %161 = vperm.xlu0 %160, %v45
    %v162 = vpop.permute.xlu0 %161
    %vm164 = vcmp.eq.s32.totalorder %v47, 9
    %v165 = vsel %vm164, 1, 0
    %v166 = vlaneseq
    %v167 = vshrl.u32 %v166, 7
    %v168 = vsub.s32 0, %v167
    %v169 = vrot.slane %v165, %v168
    %vm170 = vcmp.eq.s32.totalorder %v169, 1
    %v171 = vsel %vm170, %v162, %v159
    %172 = vset.pattern.permute.xlu0 10
    %173 = vperm.xlu0 %172, %v45
    %v174 = vpop.permute.xlu0 %173
    %vm176 = vcmp.eq.s32.totalorder %v47, 10
    %v177 = vsel %vm176, 1, 0
    %v178 = vlaneseq
    %v179 = vshrl.u32 %v178, 7
    %v180 = vsub.s32 0, %v179
    %v181 = vrot.slane %v177, %v180
    %vm182 = vcmp.eq.s32.totalorder %v181, 1
    %v183 = vsel %vm182, %v174, %v171
    %184 = vset.pattern.permute.xlu0 11
    %185 = vperm.xlu0 %184, %v45
    %v186 = vpop.permute.xlu0 %185
    %vm188 = vcmp.eq.s32.totalorder %v47, 11
    %v189 = vsel %vm188, 1, 0
    %v190 = vlaneseq
    %v191 = vshrl.u32 %v190, 7
    %v192 = vsub.s32 0, %v191
    %v193 = vrot.slane %v189, %v192
    %vm194 = vcmp.eq.s32.totalorder %v193, 1
    %v195 = vsel %vm194, %v186, %v183
    %196 = vset.pattern.permute.xlu0 12
    %197 = vperm.xlu0 %196, %v45
    %v198 = vpop.permute.xlu0 %197
    %vm200 = vcmp.eq.s32.totalorder %v47, 12
    %v201 = vsel %vm200, 1, 0
    %v202 = vlaneseq
    %v203 = vshrl.u32 %v202, 7
    %v204 = vsub.s32 0, %v203
    %v205 = vrot.slane %v201, %v204
    %vm206 = vcmp.eq.s32.totalorder %v205, 1
    %v207 = vsel %vm206, %v198, %v195
    %208 = vset.pattern.permute.xlu0 13
    %209 = vperm.xlu0 %208, %v45
    %v210 = vpop.permute.xlu0 %209
    %vm212 = vcmp.eq.s32.totalorder %v47, 13
    %v213 = vsel %vm212, 1, 0
    %v214 = vlaneseq
    %v215 = vshrl.u32 %v214, 7
    %v216 = vsub.s32 0, %v215
    %v217 = vrot.slane %v213, %v216
    %vm218 = vcmp.eq.s32.totalorder %v217, 1
    %v219 = vsel %vm218, %v210, %v207
    %220 = vset.pattern.permute.xlu0 14
    %221 = vperm.xlu0 %220, %v45
    %v222 = vpop.permute.xlu0 %221
    %vm224 = vcmp.eq.s32.totalorder %v47, 14
    %v225 = vsel %vm224, 1, 0
    %v226 = vlaneseq
    %v227 = vshrl.u32 %v226, 7
    %v228 = vsub.s32 0, %v227
    %v229 = vrot.slane %v225, %v228
    %vm230 = vcmp.eq.s32.totalorder %v229, 1
    %v231 = vsel %vm230, %v222, %v219
    %232 = vset.pattern.permute.xlu0 15
    %233 = vperm.xlu0 %232, %v45
    %v234 = vpop.permute.xlu0 %233
    %vm236 = vcmp.eq.s32.totalorder %v47, 15
    %v237 = vsel %vm236, 1, 0
    %v238 = vlaneseq
    %v239 = vshrl.u32 %v238, 7
    %v240 = vsub.s32 0, %v239
    %v241 = vrot.slane %v237, %v240
    %vm242 = vcmp.eq.s32.totalorder %v241, 1
    %v243 = vsel %vm242, %v234, %v231
    %v244 = vmul.f32 %v49, -0.052680258
    %v245 = vmul.f32 %v244, 1.442695
    %v246 = vpow.pop %v245
    %v247 = vmul.f32 %v246, %v246
    %v248 = vsub.f32 1.0, %v247
    %v249 = vrsqrt.pop %v248
    %v250 = vmul.f32 %v248, %v249
    %vm251 = vcmp.eq.f32.partialorder %v248, inf
    %v252 = vsel %vm251, %v248, %v250
    %vm253 = vcmp.eq.f32.partialorder %v248, 0.0
    %v254 = vand.u32 %v248, 2147483648
    %v255 = vsel %vm253, %v254, %v252
    %v257 = vlaneseq
    %v258 = vshrl.u32 %v257, 7
    %v259 = vsub.s32 0, %v258
    %v260 = vrot.slane %v246, %v259
    %v262 = vmul.f32 %v243, %v260
    %v263 = vmul.f32 %v46, %v50
    %v265 = vlaneseq
    %v266 = vshrl.u32 %v265, 7
    %v267 = vsub.s32 0, %v266
    %v268 = vrot.slane %v255, %v267
    %v270 = vmul.f32 %v263, %v268
    %v271 = vadd.f32 %v262, %v270
    %272 = vst [vmem:[#allocation7] sm:$0xf] %v271
    // Predicated region
    $region30: #{tpu_custom_call.1} parent=1 // pred_check
      _
    $region31: #{tpu_custom_call.1} parent=1 // pred_check_branch
      %274 = sbr.rel (0) target = $region33
    $region32: #{tpu_custom_call.1} parent=1 // pred_region
      %s276 = ssub.s32 64, 64
      %277 = vsyncadd [#allocation4], %s276
      %s279 = sshll.u32 [#allocation7], 4
      %s280 = int_to_ptr.vmem [resolvable:$true] %s279
      %282 = dma.vmem_to_hbm [thread:$0]  %s280, 64, %s5, [#allocation4]
    $region33: #{tpu_custom_call.1} parent=1 // pred_fallthru
      _
    // Predicated region
    $region34: #{tpu_custom_call.1} parent=1 // pred_check
      _
    $region35: #{tpu_custom_call.1} parent=1 // pred_check_branch
      %284 = sbr.rel (0) target = $region37
    $region36: #{tpu_custom_call.1} parent=1 // pred_region
      %285 = dma.done [#allocation4], 64
    $region37: #{tpu_custom_call.1} parent=1 // pred_fallthru
      _
    %286 = vsyncpa [#allocation3], 1
    %287 = vsyncpa [#allocation6], 1
    %288 = vsyncpa [#allocation4], 1

</llo_original>
